<compile_context>
chip_gen: v6e
topology: v6e:2x2x1
jax: 0.10.0
libtpu: 0.0.40
codegen_flags: <defaults>
</compile_context>

<pallas_src>
import jax
import jax.numpy as jnp
from jax.experimental import pallas as pl
from jax.experimental.pallas import tpu as pltpu

HIDDEN = 64
BN_EPS = 1e-5
LANE = 128
SUBLANE = 8


def regression_resnet_kernel(x_ref,
                             w_in_ref, b_in_ref,
                             w1_ref, b1_ref,
                             w2_ref, b2_ref,
                             w_out_ref, b_out_ref,
                             out_ref):
    x = x_ref[...]

    # fc_input
    h = jnp.dot(x, w_in_ref[...], preferred_element_type=jnp.float32) + b_in_ref[...]

    # BasicBlock(64 -> 64): shortcut is Identity since in_features == out_features
    identity = h

    # fc1 (+ folded bn1) -> relu -> dropout (identity at inference)
    o = jnp.dot(h, w1_ref[...], preferred_element_type=jnp.float32) + b1_ref[...]
    o = jnp.maximum(o, 0.0)

    # fc2 (+ folded bn2)
    o = jnp.dot(o, w2_ref[...], preferred_element_type=jnp.float32) + b2_ref[...]

    # residual add + relu
    o = jnp.maximum(o + identity, 0.0)

    # dropout (identity at inference) -> fc_output (output lanes zero-padded to >=128)
    out_ref[...] = jnp.dot(o, w_out_ref[...],
                           preferred_element_type=jnp.float32) + b_out_ref[...]


def _round_up(a, m):
    return ((a + m - 1) // m) * m


def fold_bn(gamma, beta, running_mean, running_var, eps=BN_EPS):
    scale = gamma / jnp.sqrt(running_var + eps)
    shift = beta - running_mean * scale
    return scale.reshape(1, -1), shift.reshape(1, -1)


def init_params(key, input_size, output_size):
    ks = jax.random.split(key, 12)

    def linear(kw, kb, fan_in, fan_out):
        bound = 1.0 / jnp.sqrt(fan_in)
        w = jax.random.uniform(kw, (fan_in, fan_out), jnp.float32, -bound, bound)
        b = jax.random.uniform(kb, (1, fan_out), jnp.float32, -bound, bound)
        return w, b

    w_in, b_in = linear(ks[0], ks[1], input_size, HIDDEN)
    w1, b1 = linear(ks[2], ks[3], HIDDEN, HIDDEN)
    w2, b2 = linear(ks[4], ks[5], HIDDEN, HIDDEN)
    w_out, b_out = linear(ks[6], ks[7], HIDDEN, output_size)

    # BatchNorm params (deterministic, non-trivial to exercise the affine path)
    g1 = 1.0 + 0.1 * jax.random.normal(ks[8], (HIDDEN,), jnp.float32)
    be1 = 0.1 * jax.random.normal(ks[9], (HIDDEN,), jnp.float32)
    rm1 = 0.05 * jax.random.normal(ks[8], (HIDDEN,), jnp.float32)
    rv1 = 1.0 + 0.1 * jnp.abs(jax.random.normal(ks[9], (HIDDEN,), jnp.float32))
    s1, t1 = fold_bn(g1, be1, rm1, rv1)

    g2 = 1.0 + 0.1 * jax.random.normal(ks[10], (HIDDEN,), jnp.float32)
    be2 = 0.1 * jax.random.normal(ks[11], (HIDDEN,), jnp.float32)
    rm2 = 0.05 * jax.random.normal(ks[10], (HIDDEN,), jnp.float32)
    rv2 = 1.0 + 0.1 * jnp.abs(jax.random.normal(ks[11], (HIDDEN,), jnp.float32))
    s2, t2 = fold_bn(g2, be2, rm2, rv2)

    return dict(w_in=w_in, b_in=b_in,
                w1=w1, b1=b1, s1=s1, t1=t1,
                w2=w2, b2=b2, s2=s2, t2=t2,
                w_out=w_out, b_out=b_out)


def _prepare_folded_params(params):
    """Fold BN scale/shift into fc1/fc2 and pad fc_output to a lane-dense width."""
    out_size = params["w_out"].shape[1]
    out_pad = max(LANE, _round_up(out_size, LANE))

    # Fold BN: (x @ W + b) * s + t == x @ (W * s) + (b * s + t)   (s, t are (1, HIDDEN))
    w1f = params["w1"] * params["s1"]
    b1f = params["b1"] * params["s1"] + params["t1"]
    w2f = params["w2"] * params["s2"]
    b2f = params["b2"] * params["s2"] + params["t2"]

    # Lane-dense output head: zero-pad the output feature axis to a multiple of 128.
    w_out_p = jnp.zeros((HIDDEN, out_pad), jnp.float32).at[:, :out_size].set(params["w_out"])
    b_out_p = jnp.zeros((1, out_pad), jnp.float32).at[:, :out_size].set(params["b_out"])

    return (params["w_in"], params["b_in"], w1f, b1f, w2f, b2f, w_out_p, b_out_p), out_pad


def regression_model_forward(x, params, tb=1024):
    """Batch-tiled Pallas forward pass. `tb` is the batch tile; 512-2048 is the sweet spot
    for large B (tile-size roofline); small batches collapse to a single tile."""
    B, in_size = x.shape
    out_size = params["w_out"].shape[1]

    weight_args, out_pad = _prepare_folded_params(params)

    # Pick the batch tile: sublane-rounded, at most `tb`, at least the (rounded) batch itself,
    # then pad B up to a multiple of TB (padded rows are sliced off afterwards).
    tb = max(SUBLANE, (tb // SUBLANE) * SUBLANE)
    TB = min(tb, _round_up(B, SUBLANE))
    B_pad = _round_up(B, TB)
    if B_pad != B:
        x = jnp.pad(x, ((0, B_pad - B), (0, 0)))

    grid = (B_pad // TB,)

    # Weights/biases: full-array blocks with constant index_maps -> VMEM-resident across tiles.
    def const_spec(arr):
        return pl.BlockSpec(arr.shape, lambda i: (0, 0))

    in_specs = [pl.BlockSpec((TB, in_size), lambda i: (i, 0))] + \
               [const_spec(a) for a in weight_args]
    out_specs = pl.BlockSpec((TB, out_pad), lambda i: (i, 0))

    y_pad = pl.pallas_call(
        regression_resnet_kernel,
        out_shape=jax.ShapeDtypeStruct((B_pad, out_pad), jnp.float32),
        grid=grid,
        in_specs=in_specs,
        out_specs=out_specs,
        compiler_params=pltpu.CompilerParams(
            dimension_semantics=("parallel",),   # v7x: shard batch tiles across both TCs
            vmem_limit_bytes=64 << 20,           # explicit budget; safe on v7x's 64 MiB VMEM
        ),
    )(x, *weight_args)

    # Slice off batch padding and the zero-padded output lanes.
    return y_pad[:B, :out_size]


def reference_forward(x, p):
    h = x @ p["w_in"] + p["b_in"]
    ident = h
    o = jnp.maximum((h @ p["w1"] + p["b1"]) * p["s1"] + p["t1"], 0.0)
    o = (o @ p["w2"] + p["b2"]) * p["s2"] + p["t2"]
    o = jnp.maximum(o + ident, 0.0)
    return o @ p["w_out"] + p["b_out"]


if __name__ == "__main__":
    batch = 8
    input_size = 32
    output_size = 8

    key = jax.random.PRNGKey(0)
    kx, kp = jax.random.split(key)
    x = jax.random.normal(kx, (batch, input_size), jnp.float32)
    params = init_params(kp, input_size, output_size)

    # Primary small-shape run.
    y = regression_model_forward(x, params)
    jax.block_until_ready(y)
    y_ref = reference_forward(x, params)
    assert y.shape == (batch, output_size)
    assert jnp.allclose(y, y_ref, atol=1e-4, rtol=1e-4)

    # Exercise the tiled/padded path (B not a multiple of the tile).
    x2 = jax.random.normal(jax.random.PRNGKey(1), (200, input_size), jnp.float32)
    y2 = regression_model_forward(x2, params, tb=128)
    jax.block_until_ready(y2)
    y2_ref = reference_forward(x2, params)
    assert y2.shape == (200, output_size)
    assert jnp.allclose(y2, y2_ref, atol=1e-4, rtol=1e-4)

    print("KERNEL_OK")
</pallas_src>

<mosaic_0001>
module attributes {stable_mosaic.version = 11 : i64} {
  func.func @regression_resnet_kernel(%arg0: i32, %arg1: memref<8x32xf32, #tpu.memory_space<vmem>>, %arg2: memref<32x64xf32, #tpu.memory_space<vmem>>, %arg3: memref<1x64xf32, #tpu.memory_space<vmem>>, %arg4: memref<64x64xf32, #tpu.memory_space<vmem>>, %arg5: memref<1x64xf32, #tpu.memory_space<vmem>>, %arg6: memref<64x64xf32, #tpu.memory_space<vmem>>, %arg7: memref<1x64xf32, #tpu.memory_space<vmem>>, %arg8: memref<64x128xf32, #tpu.memory_space<vmem>>, %arg9: memref<1x128xf32, #tpu.memory_space<vmem>>, %arg10: memref<8x128xf32, #tpu.memory_space<vmem>>) attributes {dimension_semantics = [#tpu.dimension_semantics<parallel>], iteration_bounds = array<i64: 1>, scalar_prefetch = 0 : i64, scratch_operands = 0 : i64, tpu.core_type = #tpu.core_type<tc>, window_params = [{transform_indices = @transform_0, window_bounds = array<i64: 8, 32>}, {pipeline_mode = #tpu.pipeline_mode<synchronous>, transform_indices = @transform_1, window_bounds = array<i64: 32, 64>}, {pipeline_mode = #tpu.pipeline_mode<synchronous>, transform_indices = @transform_2, window_bounds = array<i64: 1, 64>}, {pipeline_mode = #tpu.pipeline_mode<synchronous>, transform_indices = @transform_3, window_bounds = array<i64: 64, 64>}, {pipeline_mode = #tpu.pipeline_mode<synchronous>, transform_indices = @transform_4, window_bounds = array<i64: 1, 64>}, {pipeline_mode = #tpu.pipeline_mode<synchronous>, transform_indices = @transform_5, window_bounds = array<i64: 64, 64>}, {pipeline_mode = #tpu.pipeline_mode<synchronous>, transform_indices = @transform_6, window_bounds = array<i64: 1, 64>}, {pipeline_mode = #tpu.pipeline_mode<synchronous>, transform_indices = @transform_7, window_bounds = array<i64: 64, 128>}, {pipeline_mode = #tpu.pipeline_mode<synchronous>, transform_indices = @transform_8, window_bounds = array<i64: 1, 128>}, {transform_indices = @transform_9, window_bounds = array<i64: 8, 128>}]} {
    %c0 = arith.constant 0 : index
    %c0_0 = arith.constant 0 : index
    %0 = vector.load %arg1[%c0, %c0_0] : memref<8x32xf32, #tpu.memory_space<vmem>>, vector<8x32xf32>
    %c0_1 = arith.constant 0 : index
    %c0_2 = arith.constant 0 : index
    %1 = vector.load %arg2[%c0_1, %c0_2] : memref<32x64xf32, #tpu.memory_space<vmem>>, vector<32x64xf32>
    %cst = arith.constant dense<0.000000e+00> : vector<8x64xf32>
    %2 = tpu.matmul %0, %1, %cst {dimension_numbers = #tpu.dot_dimension_numbers<[1], [0], [0], [1], [0, 0, 1, 1], [], []>} : vector<8x32xf32>, vector<32x64xf32>, vector<8x64xf32> -> vector<8x64xf32>
    %c0_3 = arith.constant 0 : index
    %c0_4 = arith.constant 0 : index
    %3 = vector.load %arg3[%c0_3, %c0_4] : memref<1x64xf32, #tpu.memory_space<vmem>>, vector<1x64xf32>
    %4 = vector.broadcast %3 : vector<1x64xf32> to vector<8x64xf32>
    %5 = arith.addf %2, %4 : vector<8x64xf32>
    %c0_5 = arith.constant 0 : index
    %c0_6 = arith.constant 0 : index
    %6 = vector.load %arg4[%c0_5, %c0_6] : memref<64x64xf32, #tpu.memory_space<vmem>>, vector<64x64xf32>
    %cst_7 = arith.constant dense<0.000000e+00> : vector<8x64xf32>
    %7 = tpu.matmul %5, %6, %cst_7 {dimension_numbers = #tpu.dot_dimension_numbers<[1], [0], [0], [1], [0, 0, 1, 1], [], []>} : vector<8x64xf32>, vector<64x64xf32>, vector<8x64xf32> -> vector<8x64xf32>
    %c0_8 = arith.constant 0 : index
    %c0_9 = arith.constant 0 : index
    %8 = vector.load %arg5[%c0_8, %c0_9] : memref<1x64xf32, #tpu.memory_space<vmem>>, vector<1x64xf32>
    %9 = vector.broadcast %8 : vector<1x64xf32> to vector<8x64xf32>
    %10 = arith.addf %7, %9 : vector<8x64xf32>
    %cst_10 = arith.constant 0.000000e+00 : f32
    %11 = vector.broadcast %cst_10 : f32 to vector<8x64xf32>
    %12 = arith.maximumf %10, %11 : vector<8x64xf32>
    %c0_11 = arith.constant 0 : index
    %c0_12 = arith.constant 0 : index
    %13 = vector.load %arg6[%c0_11, %c0_12] : memref<64x64xf32, #tpu.memory_space<vmem>>, vector<64x64xf32>
    %cst_13 = arith.constant dense<0.000000e+00> : vector<8x64xf32>
    %14 = tpu.matmul %12, %13, %cst_13 {dimension_numbers = #tpu.dot_dimension_numbers<[1], [0], [0], [1], [0, 0, 1, 1], [], []>} : vector<8x64xf32>, vector<64x64xf32>, vector<8x64xf32> -> vector<8x64xf32>
    %c0_14 = arith.constant 0 : index
    %c0_15 = arith.constant 0 : index
    %15 = vector.load %arg7[%c0_14, %c0_15] : memref<1x64xf32, #tpu.memory_space<vmem>>, vector<1x64xf32>
    %16 = vector.broadcast %15 : vector<1x64xf32> to vector<8x64xf32>
    %17 = arith.addf %14, %16 : vector<8x64xf32>
    %18 = arith.addf %17, %5 : vector<8x64xf32>
    %cst_16 = arith.constant 0.000000e+00 : f32
    %19 = vector.broadcast %cst_16 : f32 to vector<8x64xf32>
    %20 = arith.maximumf %18, %19 : vector<8x64xf32>
    %c0_17 = arith.constant 0 : index
    %c0_18 = arith.constant 0 : index
    %21 = vector.load %arg8[%c0_17, %c0_18] : memref<64x128xf32, #tpu.memory_space<vmem>>, vector<64x128xf32>
    %cst_19 = arith.constant dense<0.000000e+00> : vector<8x128xf32>
    %22 = tpu.matmul %20, %21, %cst_19 {dimension_numbers = #tpu.dot_dimension_numbers<[1], [0], [0], [1], [0, 0, 1, 1], [], []>} : vector<8x64xf32>, vector<64x128xf32>, vector<8x128xf32> -> vector<8x128xf32>
    %c0_20 = arith.constant 0 : index
    %c0_21 = arith.constant 0 : index
    %23 = vector.load %arg9[%c0_20, %c0_21] : memref<1x128xf32, #tpu.memory_space<vmem>>, vector<1x128xf32>
    %24 = vector.broadcast %23 : vector<1x128xf32> to vector<8x128xf32>
    %25 = arith.addf %22, %24 : vector<8x128xf32>
    %c0_22 = arith.constant 0 : index
    %c0_23 = arith.constant 0 : index
    %26 = vector.load %arg10[%c0_22, %c0_23] : memref<8x128xf32, #tpu.memory_space<vmem>>, vector<8x128xf32>
    tpu.vector_store %arg10[%c0_22, %c0_23], %25 {strides = array<i32>} : memref<8x128xf32, #tpu.memory_space<vmem>>, vector<8x128xf32>,
    return
  }
  func.func @transform_0(%arg0: i32) -> (i32, i32) {
    %c0_i32 = arith.constant 0 : i32
    %c0_i32_0 = arith.constant 0 : i32
    return %arg0, %c0_i32 : i32, i32
  }
  func.func @transform_1(%arg0: i32) -> (i32, i32) {
    %c0_i32 = arith.constant 0 : i32
    %c0_i32_0 = arith.constant 0 : i32
    %c0_i32_1 = arith.constant 0 : i32
    return %c0_i32, %c0_i32_0 : i32, i32
  }
  func.func @transform_2(%arg0: i32) -> (i32, i32) {
    %c0_i32 = arith.constant 0 : i32
    %c0_i32_0 = arith.constant 0 : i32
    %c0_i32_1 = arith.constant 0 : i32
    return %c0_i32, %c0_i32_0 : i32, i32
  }
  func.func @transform_3(%arg0: i32) -> (i32, i32) {
    %c0_i32 = arith.constant 0 : i32
    %c0_i32_0 = arith.constant 0 : i32
    %c0_i32_1 = arith.constant 0 : i32
    return %c0_i32, %c0_i32_0 : i32, i32
  }
  func.func @transform_4(%arg0: i32) -> (i32, i32) {
    %c0_i32 = arith.constant 0 : i32
    %c0_i32_0 = arith.constant 0 : i32
    %c0_i32_1 = arith.constant 0 : i32
    return %c0_i32, %c0_i32_0 : i32, i32
  }
  func.func @transform_5(%arg0: i32) -> (i32, i32) {
    %c0_i32 = arith.constant 0 : i32
    %c0_i32_0 = arith.constant 0 : i32
    %c0_i32_1 = arith.constant 0 : i32
    return %c0_i32, %c0_i32_0 : i32, i32
  }
  func.func @transform_6(%arg0: i32) -> (i32, i32) {
    %c0_i32 = arith.constant 0 : i32
    %c0_i32_0 = arith.constant 0 : i32
    %c0_i32_1 = arith.constant 0 : i32
    return %c0_i32, %c0_i32_0 : i32, i32
  }
  func.func @transform_7(%arg0: i32) -> (i32, i32) {
    %c0_i32 = arith.constant 0 : i32
    %c0_i32_0 = arith.constant 0 : i32
    %c0_i32_1 = arith.constant 0 : i32
    return %c0_i32, %c0_i32_0 : i32, i32
  }
  func.func @transform_8(%arg0: i32) -> (i32, i32) {
    %c0_i32 = arith.constant 0 : i32
    %c0_i32_0 = arith.constant 0 : i32
    %c0_i32_1 = arith.constant 0 : i32
    return %c0_i32, %c0_i32_0 : i32, i32
  }
  func.func @transform_9(%arg0: i32) -> (i32, i32) {
    %c0_i32 = arith.constant 0 : i32
    %c0_i32_0 = arith.constant 0 : i32
    return %arg0, %c0_i32 : i32, i32
  }
}

</mosaic_0001>

<llo_original>
// kernel: tpu_custom_call.1
$region0: #{tpu_custom_call.1}
  #allocation0 [shape = 'u32[]', space=smem, size = 0x4, offset = 0x4, fixed_abs, tag = 'smem constant byte address 0x4 - core index']
  #allocation1 [shape = 'u32[144,128]{1,0:T(1,128)}', space=vmem, size = 0x12000, scoped, tag = 'internal scratch']
  %s0 = inlined_call_operand.hbm [shape: f32[8,32], index: 0, kind: input, shape index: {}]
  %s1 = inlined_call_operand.hbm [shape: f32[32,64], index: 1, kind: input, shape index: {}]
  %s2 = inlined_call_operand.vmem [shape: f32[1,64], index: 2, kind: input, shape index: {}]
  %s3 = inlined_call_operand.hbm [shape: f32[64,64], index: 3, kind: input, shape index: {}]
  %s4 = inlined_call_operand.vmem [shape: f32[1,64], index: 4, kind: input, shape index: {}]
  %s5 = inlined_call_operand.hbm [shape: f32[64,64], index: 5, kind: input, shape index: {}]
  %s6 = inlined_call_operand.vmem [shape: f32[1,64], index: 6, kind: input, shape index: {}]
  %s7 = inlined_call_operand.hbm [shape: f32[64,128], index: 7, kind: input, shape index: {}]
  %s8 = inlined_call_operand.vmem [shape: f32[1,128], index: 8, kind: input, shape index: {}]
  %s9 = inlined_call_operand.hbm [shape: f32[8,128], index: 9, kind: output, shape index: {}]
  %s10 = sld [smem:[#allocation0]]
  $region66: #{tpu_custom_call.1} parent=0
    _
  %s12 = ssub.s32 1, %s10
  %s13 = scalar_select 0, %s12, %s10
  $region1: #{tpu_custom_call.1} parent=0
    #allocation2 [shape = 'u8[4096]{0}', space=vmem, size = 0x1000, scoped, tag = 'input window, operand 0, single buffered']
    #allocation3 [shape = 's32[1]{0}', space=sflag, size = 0x4, scoped, tag = 'scoped memory for tpu_custom_call.1']
    #allocation4 [shape = 's32[1]{0}', space=sflag, size = 0x4, scoped, tag = 'scoped memory for tpu_custom_call.1']
    #allocation5 [shape = 'u8[16384]{0}', space=vmem, size = 0x4000, scoped, tag = 'input window, operand 1, single buffered']
    #allocation6 [shape = 's32[1]{0}', space=sflag, size = 0x4, scoped, tag = 'scoped memory for tpu_custom_call.1']
    #allocation7 [shape = 'u8[32768]{0}', space=vmem, size = 0x8000, scoped, tag = 'input window, operand 3, single buffered']
    #allocation8 [shape = 'u8[32768]{0}', space=vmem, size = 0x8000, scoped, tag = 'input window, operand 5, single buffered']
    #allocation9 [shape = 's32[1]{0}', space=sflag, size = 0x4, scoped, tag = 'scoped memory for tpu_custom_call.1']
    #allocation10 [shape = 'u8[32768]{0}', space=vmem, size = 0x8000, scoped, tag = 'input window, operand 7, single buffered']
    #allocation11 [shape = 'u8[4096]{0}', space=vmem, size = 0x1000, scoped, tag = 'output window, operand 0, single buffered']
    %14 = vsyncpa [#allocation3], 0
    %15 = vsyncpa [#allocation6], 0
    %16 = vsyncpa [#allocation9], 0
    %17 = vsyncpa [#allocation4], 0
    // Predicated region
    $region2: #{tpu_custom_call.1} parent=1 // pred_check
      _
    $region3: #{tpu_custom_call.1} parent=1 // pred_check_branch
      %19 = sbr.rel (0) target = $region5
    $region4: #{tpu_custom_call.1} parent=1 // pred_region
      %s21 = ssub.s32 128, 128
      %22 = vsyncadd [#allocation3], %s21
      %s24 = sshll.u32 [#allocation2], 4
      %s25 = int_to_ptr.vmem [resolvable:$true] %s24
      %27 = dma.hbm_to_vmem [thread:$0]  %s0, 128, %s25, [#allocation3]
    $region5: #{tpu_custom_call.1} parent=1 // pred_fallthru
      _
    // Predicated region
    $region6: #{tpu_custom_call.1} parent=1 // pred_check
      _
    $region7: #{tpu_custom_call.1} parent=1 // pred_check_branch
      %29 = sbr.rel (0) target = $region9
    $region8: #{tpu_custom_call.1} parent=1 // pred_region
      %s31 = ssub.s32 512, 512
      %32 = vsyncadd [#allocation6], %s31
      %s33 = sshll.u32 [#allocation5], 4
      %s34 = int_to_ptr.vmem [resolvable:$true] %s33
      %39 = dma.hbm_to_vmem [thread:$0]  %s1, 512, %s34, [#allocation6], 128, 128, 8
    $region9: #{tpu_custom_call.1} parent=1 // pred_fallthru
      _
    // Predicated region
    $region10: #{tpu_custom_call.1} parent=1 // pred_check
      _
    $region11: #{tpu_custom_call.1} parent=1 // pred_check_branch
      %41 = sbr.rel (0) target = $region13
    $region12: #{tpu_custom_call.1} parent=1 // pred_region
      _
    $region13: #{tpu_custom_call.1} parent=1 // pred_fallthru
      _
    // Predicated region
    $region14: #{tpu_custom_call.1} parent=1 // pred_check
      _
    $region15: #{tpu_custom_call.1} parent=1 // pred_check_branch
      %43 = sbr.rel (0) target = $region17
    $region16: #{tpu_custom_call.1} parent=1 // pred_region
      %s45 = ssub.s32 1024, 1024
      %46 = vsyncadd [#allocation6], %s45
      %s47 = sshll.u32 [#allocation7], 4
      %s48 = int_to_ptr.vmem [resolvable:$true] %s47
      %53 = dma.hbm_to_vmem [thread:$0]  %s3, 1024, %s48, [#allocation6], 128, 128, 8
    $region17: #{tpu_custom_call.1} parent=1 // pred_fallthru
      _
    // Predicated region
    $region18: #{tpu_custom_call.1} parent=1 // pred_check
      _
    $region19: #{tpu_custom_call.1} parent=1 // pred_check_branch
      %55 = sbr.rel (0) target = $region21
    $region20: #{tpu_custom_call.1} parent=1 // pred_region
      _
    $region21: #{tpu_custom_call.1} parent=1 // pred_fallthru
      _
    // Predicated region
    $region22: #{tpu_custom_call.1} parent=1 // pred_check
      _
    $region23: #{tpu_custom_call.1} parent=1 // pred_check_branch
      %57 = sbr.rel (0) target = $region25
    $region24: #{tpu_custom_call.1} parent=1 // pred_region
      %s59 = ssub.s32 1024, 1024
      %60 = vsyncadd [#allocation9], %s59
      %s61 = sshll.u32 [#allocation8], 4
      %s62 = int_to_ptr.vmem [resolvable:$true] %s61
      %67 = dma.hbm_to_vmem [thread:$0]  %s5, 1024, %s62, [#allocation9], 128, 128, 8
    $region25: #{tpu_custom_call.1} parent=1 // pred_fallthru
      _
    // Predicated region
    $region26: #{tpu_custom_call.1} parent=1 // pred_check
      _
    $region27: #{tpu_custom_call.1} parent=1 // pred_check_branch
      %69 = sbr.rel (0) target = $region29
    $region28: #{tpu_custom_call.1} parent=1 // pred_region
      _
    $region29: #{tpu_custom_call.1} parent=1 // pred_fallthru
      _
    // Predicated region
    $region30: #{tpu_custom_call.1} parent=1 // pred_check
      _
    $region31: #{tpu_custom_call.1} parent=1 // pred_check_branch
      %71 = sbr.rel (0) target = $region33
    $region32: #{tpu_custom_call.1} parent=1 // pred_region
      %s73 = ssub.s32 1024, 1024
      %74 = vsyncadd [#allocation9], %s73
      %s75 = sshll.u32 [#allocation10], 4
      %s76 = int_to_ptr.vmem [resolvable:$true] %s75
      %81 = dma.hbm_to_vmem [thread:$0]  %s7, 1024, %s76, [#allocation9], 128, 128, 8
    $region33: #{tpu_custom_call.1} parent=1 // pred_fallthru
      _
    // Predicated region
    $region34: #{tpu_custom_call.1} parent=1 // pred_check
      _
    $region35: #{tpu_custom_call.1} parent=1 // pred_check_branch
      %83 = sbr.rel (0) target = $region37
    $region36: #{tpu_custom_call.1} parent=1 // pred_region
      _
    $region37: #{tpu_custom_call.1} parent=1 // pred_fallthru
      _
    // Predicated region
    $region38: #{tpu_custom_call.1} parent=1 // pred_check
      _
    $region39: #{tpu_custom_call.1} parent=1 // pred_check_branch
      %85 = sbr.rel (0) target = $region41
    $region40: #{tpu_custom_call.1} parent=1 // pred_region
      %86 = dma.done [#allocation3], 128
    $region41: #{tpu_custom_call.1} parent=1 // pred_fallthru
      _
    // Predicated region
    $region42: #{tpu_custom_call.1} parent=1 // pred_check
      _
    $region43: #{tpu_custom_call.1} parent=1 // pred_check_branch
      %88 = sbr.rel (0) target = $region45
    $region44: #{tpu_custom_call.1} parent=1 // pred_region
      %89 = dma.done [#allocation6], 512
    $region45: #{tpu_custom_call.1} parent=1 // pred_fallthru
      _
    // Predicated region
    $region46: #{tpu_custom_call.1} parent=1 // pred_check
      _
    $region47: #{tpu_custom_call.1} parent=1 // pred_check_branch
      %91 = sbr.rel (0) target = $region49
    $region48: #{tpu_custom_call.1} parent=1 // pred_region
      %92 = dma.done [#allocation6], 1024
    $region49: #{tpu_custom_call.1} parent=1 // pred_fallthru
      _
    // Predicated region
    $region50: #{tpu_custom_call.1} parent=1 // pred_check
      _
    $region51: #{tpu_custom_call.1} parent=1 // pred_check_branch
      %94 = sbr.rel (0) target = $region53
    $region52: #{tpu_custom_call.1} parent=1 // pred_region
      %95 = dma.done [#allocation9], 1024
    $region53: #{tpu_custom_call.1} parent=1 // pred_fallthru
      _
    // Predicated region
    $region54: #{tpu_custom_call.1} parent=1 // pred_check
      _
    $region55: #{tpu_custom_call.1} parent=1 // pred_check_branch
      %97 = sbr.rel (0) target = $region57
    $region56: #{tpu_custom_call.1} parent=1 // pred_region
      %98 = dma.done [#allocation9], 1024
    $region57: #{tpu_custom_call.1} parent=1 // pred_fallthru
      _
    %v99 = vld [vmem:[#allocation2] sm:$0xff]
    %v100 = vld [vmem:[#allocation5] sm:$0xff]
    %v101 = vld [vmem:[#allocation5 + $0x8] sm:$0xff]
    %v102 = vld [vmem:[#allocation5 + $0x10] sm:$0xff]
    %v103 = vld [vmem:[#allocation5 + $0x18] sm:$0xff]
    %v104 = vld [vmem:[%s2] sm:$0x1]
    %v106 = vlaneseq
    %v107 = vshrl.u32 %v106, 7
    %v108 = vsub.s32 0, %v107
    %v109 = vrot.slane %v104, %v108
    %vm111 = vcmask 261120
    %v113 = vsel %vm111, %v99, 0
    %115 = vmatprep.subr.mxu0 0.0
    %116 = vmatpush1.msra.mxu0 0.0
    %117 = vmatprep.subr.mxu0 0.0
    %118 = vmatpush1.msra.mxu0 0.0
    %119 = vmatprep.subr.mxu0 0.0
    %120 = vmatpush1.msra.mxu0 0.0
    %121 = vmatprep.subr.mxu0 0.0
    %122 = vmatpush1.msra.mxu0 0.0
    %123 = vmatprep.subr.mxu0 0.0
    %124 = vmatpush1.msra.mxu0 0.0
    %125 = vmatprep.subr.mxu0 0.0
    %126 = vmatpush1.msra.mxu0 0.0
    %127 = vmatprep.subr.mxu0 0.0
    %128 = vmatpush1.msra.mxu0 0.0
    %129 = vmatprep.subr.mxu0 0.0
    %130 = vmatpush1.msra.mxu0 0.0
    %131 = vmatprep.subr.mxu0 0.0
    %132 = vmatpush1.msra.mxu0 0.0
    %133 = vmatprep.subr.mxu0 0.0
    %134 = vmatpush1.msra.mxu0 0.0
    %135 = vmatprep.subr.mxu0 0.0
    %136 = vmatpush1.msra.mxu0 0.0
    %137 = vmatprep.subr.mxu0 0.0
    %138 = vmatpush1.msra.mxu0 0.0
    %139 = vmatprep.subr.mxu0 0.0
    %140 = vmatpush1.msra.mxu0 %v103
    %141 = vmatprep.subr.mxu0 0.0
    %142 = vmatpush1.msra.mxu0 %v102
    %143 = vmatprep.subr.mxu0 0.0
    %144 = vmatpush1.msra.mxu0 %v101
    %145 = vmatprep.subr.mxu0 0.0
    %146 = vmatpush1.msra.mxu0 %v100
    %147 = vmatprep.subr.mxu0 0.0
    %148 = vmatpush2.msra.mxu0 0.0
    %149 = vmatprep.subr.mxu0 0.0
    %150 = vmatpush2.msra.mxu0 0.0
    %151 = vmatprep.subr.mxu0 0.0
    %152 = vmatpush2.msra.mxu0 0.0
    %153 = vmatprep.subr.mxu0 0.0
    %154 = vmatpush2.msra.mxu0 0.0
    %155 = vmatprep.subr.mxu0 0.0
    %156 = vmatpush2.msra.mxu0 0.0
    %157 = vmatprep.subr.mxu0 0.0
    %158 = vmatpush2.msra.mxu0 0.0
    %159 = vmatprep.subr.mxu0 0.0
    %160 = vmatpush2.msra.mxu0 0.0
    %161 = vmatprep.subr.mxu0 0.0
    %162 = vmatpush2.msra.mxu0 0.0
    %163 = vmatprep.subr.mxu0 0.0
    %164 = vmatpush2.msra.mxu0 0.0
    %165 = vmatprep.subr.mxu0 0.0
    %166 = vmatpush2.msra.mxu0 0.0
    %167 = vmatprep.subr.mxu0 0.0
    %168 = vmatpush2.msra.mxu0 0.0
    %169 = vmatprep.subr.mxu0 0.0
    %170 = vmatpush2.msra.mxu0 0.0
    %171 = vmatprep.subr.mxu0 0.0
    %172 = vmatpush2.msra.mxu0 0.0
    %173 = vmatprep.subr.mxu0 0.0
    %174 = vmatpush2.msra.mxu0 0.0
    %175 = vmatprep.subr.mxu0 0.0
    %176 = vmatpush2.msra.mxu0 0.0
    %177 = vmatprep.subr.mxu0 0.0
    %178 = vmatpush2.msra.mxu0 0.0
    %179 = vmatprep.mubr.f32.mxu0 0.0
    %180 = vmatmul.mubr.f32.gmra.mxu0 %v113
    %v181 = vpop.f32.mrf.mxu0
    %v182 = vadd.f32 %v109, %v181
    %v183 = vpop.f32.mrf.mxu0
    %184 = vdwg.mxu0
    %v185 = vld [vmem:[#allocation7] sm:$0xff]
    %v186 = vld [vmem:[#allocation7 + $0x8] sm:$0xff]
    %v187 = vld [vmem:[#allocation7 + $0x10] sm:$0xff]
    %v188 = vld [vmem:[#allocation7 + $0x18] sm:$0xff]
    %v189 = vld [vmem:[#allocation7 + $0x20] sm:$0xff]
    %v190 = vld [vmem:[#allocation7 + $0x28] sm:$0xff]
    %v191 = vld [vmem:[#allocation7 + $0x30] sm:$0xff]
    %v192 = vld [vmem:[#allocation7 + $0x38] sm:$0xff]
    %v193 = vld [vmem:[%s4] sm:$0x1]
    %v195 = vlaneseq
    %v196 = vshrl.u32 %v195, 7
    %v197 = vsub.s32 0, %v196
    %v198 = vrot.slane %v193, %v197
    %vm200 = vcmask 523264
    %v202 = vsel %vm200, %v182, 0
    %204 = vmatprep.subr.mxu0 0.0
    %205 = vmatpush1.msra.mxu0 0.0
    %206 = vmatprep.subr.mxu0 0.0
    %207 = vmatpush1.msra.mxu0 0.0
    %208 = vmatprep.subr.mxu0 0.0
    %209 = vmatpush1.msra.mxu0 0.0
    %210 = vmatprep.subr.mxu0 0.0
    %211 = vmatpush1.msra.mxu0 0.0
    %212 = vmatprep.subr.mxu0 0.0
    %213 = vmatpush1.msra.mxu0 0.0
    %214 = vmatprep.subr.mxu0 0.0
    %215 = vmatpush1.msra.mxu0 0.0
    %216 = vmatprep.subr.mxu0 0.0
    %217 = vmatpush1.msra.mxu0 0.0
    %218 = vmatprep.subr.mxu0 0.0
    %219 = vmatpush1.msra.mxu0 0.0
    %220 = vmatprep.subr.mxu0 0.0
    %221 = vmatpush1.msra.mxu0 %v192
    %222 = vmatprep.subr.mxu0 0.0
    %223 = vmatpush1.msra.mxu0 %v191
    %224 = vmatprep.subr.mxu0 0.0
    %225 = vmatpush1.msra.mxu0 %v190
    %226 = vmatprep.subr.mxu0 0.0
    %227 = vmatpush1.msra.mxu0 %v189
    %228 = vmatprep.subr.mxu0 0.0
    %229 = vmatpush1.msra.mxu0 %v188
    %230 = vmatprep.subr.mxu0 0.0
    %231 = vmatpush1.msra.mxu0 %v187
    %232 = vmatprep.subr.mxu0 0.0
    %233 = vmatpush1.msra.mxu0 %v186
    %234 = vmatprep.subr.mxu0 0.0
    %235 = vmatpush1.msra.mxu0 %v185
    %236 = vmatprep.subr.mxu0 0.0
    %237 = vmatpush2.msra.mxu0 0.0
    %238 = vmatprep.subr.mxu0 0.0
    %239 = vmatpush2.msra.mxu0 0.0
    %240 = vmatprep.subr.mxu0 0.0
    %241 = vmatpush2.msra.mxu0 0.0
    %242 = vmatprep.subr.mxu0 0.0
    %243 = vmatpush2.msra.mxu0 0.0
    %244 = vmatprep.subr.mxu0 0.0
    %245 = vmatpush2.msra.mxu0 0.0
    %246 = vmatprep.subr.mxu0 0.0
    %247 = vmatpush2.msra.mxu0 0.0
    %248 = vmatprep.subr.mxu0 0.0
    %249 = vmatpush2.msra.mxu0 0.0
    %250 = vmatprep.subr.mxu0 0.0
    %251 = vmatpush2.msra.mxu0 0.0
    %252 = vmatprep.subr.mxu0 0.0
    %253 = vmatpush2.msra.mxu0 0.0
    %254 = vmatprep.subr.mxu0 0.0
    %255 = vmatpush2.msra.mxu0 0.0
    %256 = vmatprep.subr.mxu0 0.0
    %257 = vmatpush2.msra.mxu0 0.0
    %258 = vmatprep.subr.mxu0 0.0
    %259 = vmatpush2.msra.mxu0 0.0
    %260 = vmatprep.subr.mxu0 0.0
    %261 = vmatpush2.msra.mxu0 0.0
    %262 = vmatprep.subr.mxu0 0.0
    %263 = vmatpush2.msra.mxu0 0.0
    %264 = vmatprep.subr.mxu0 0.0
    %265 = vmatpush2.msra.mxu0 0.0
    %266 = vmatprep.subr.mxu0 0.0
    %267 = vmatpush2.msra.mxu0 0.0
    %268 = vmatprep.mubr.f32.mxu0 0.0
    %269 = vmatmul.mubr.f32.gmra.mxu0 %v202
    %v270 = vpop.f32.mrf.mxu0
    %v271 = vadd.f32 %v198, %v270
    %v272 = vpop.f32.mrf.mxu0
    %273 = vdwg.mxu0
    %v274 = vmax.f32 %v271, 0.0
    %v275 = vld [vmem:[#allocation8] sm:$0xff]
    %v276 = vld [vmem:[#allocation8 + $0x8] sm:$0xff]
    %v277 = vld [vmem:[#allocation8 + $0x10] sm:$0xff]
    %v278 = vld [vmem:[#allocation8 + $0x18] sm:$0xff]
    %v279 = vld [vmem:[#allocation8 + $0x20] sm:$0xff]
    %v280 = vld [vmem:[#allocation8 + $0x28] sm:$0xff]
    %v281 = vld [vmem:[#allocation8 + $0x30] sm:$0xff]
    %v282 = vld [vmem:[#allocation8 + $0x38] sm:$0xff]
    %v283 = vld [vmem:[%s6] sm:$0x1]
    %v285 = vlaneseq
    %v286 = vshrl.u32 %v285, 7
    %v287 = vsub.s32 0, %v286
    %v288 = vrot.slane %v283, %v287
    %v291 = vsel %vm200, %v274, 0
    %293 = vmatprep.subr.mxu0 0.0
    %294 = vmatpush1.msra.mxu0 0.0
    %295 = vmatprep.subr.mxu0 0.0
    %296 = vmatpush1.msra.mxu0 0.0
    %297 = vmatprep.subr.mxu0 0.0
    %298 = vmatpush1.msra.mxu0 0.0
    %299 = vmatprep.subr.mxu0 0.0
    %300 = vmatpush1.msra.mxu0 0.0
    %301 = vmatprep.subr.mxu0 0.0
    %302 = vmatpush1.msra.mxu0 0.0
    %303 = vmatprep.subr.mxu0 0.0
    %304 = vmatpush1.msra.mxu0 0.0
    %305 = vmatprep.subr.mxu0 0.0
    %306 = vmatpush1.msra.mxu0 0.0
    %307 = vmatprep.subr.mxu0 0.0
    %308 = vmatpush1.msra.mxu0 0.0
    %309 = vmatprep.subr.mxu0 0.0
    %310 = vmatpush1.msra.mxu0 %v282
    %311 = vmatprep.subr.mxu0 0.0
    %312 = vmatpush1.msra.mxu0 %v281
    %313 = vmatprep.subr.mxu0 0.0
    %314 = vmatpush1.msra.mxu0 %v280
    %315 = vmatprep.subr.mxu0 0.0
    %316 = vmatpush1.msra.mxu0 %v279
    %317 = vmatprep.subr.mxu0 0.0
    %318 = vmatpush1.msra.mxu0 %v278
    %319 = vmatprep.subr.mxu0 0.0
    %320 = vmatpush1.msra.mxu0 %v277
    %321 = vmatprep.subr.mxu0 0.0
    %322 = vmatpush1.msra.mxu0 %v276
    %323 = vmatprep.subr.mxu0 0.0
    %324 = vmatpush1.msra.mxu0 %v275
    %325 = vmatprep.subr.mxu0 0.0
    %326 = vmatpush2.msra.mxu0 0.0
    %327 = vmatprep.subr.mxu0 0.0
    %328 = vmatpush2.msra.mxu0 0.0
    %329 = vmatprep.subr.mxu0 0.0
    %330 = vmatpush2.msra.mxu0 0.0
    %331 = vmatprep.subr.mxu0 0.0
    %332 = vmatpush2.msra.mxu0 0.0
    %333 = vmatprep.subr.mxu0 0.0
    %334 = vmatpush2.msra.mxu0 0.0
    %335 = vmatprep.subr.mxu0 0.0
    %336 = vmatpush2.msra.mxu0 0.0
    %337 = vmatprep.subr.mxu0 0.0
    %338 = vmatpush2.msra.mxu0 0.0
    %339 = vmatprep.subr.mxu0 0.0
    %340 = vmatpush2.msra.mxu0 0.0
    %341 = vmatprep.subr.mxu0 0.0
    %342 = vmatpush2.msra.mxu0 0.0
    %343 = vmatprep.subr.mxu0 0.0
    %344 = vmatpush2.msra.mxu0 0.0
    %345 = vmatprep.subr.mxu0 0.0
    %346 = vmatpush2.msra.mxu0 0.0
    %347 = vmatprep.subr.mxu0 0.0
    %348 = vmatpush2.msra.mxu0 0.0
    %349 = vmatprep.subr.mxu0 0.0
    %350 = vmatpush2.msra.mxu0 0.0
    %351 = vmatprep.subr.mxu0 0.0
    %352 = vmatpush2.msra.mxu0 0.0
    %353 = vmatprep.subr.mxu0 0.0
    %354 = vmatpush2.msra.mxu0 0.0
    %355 = vmatprep.subr.mxu0 0.0
    %356 = vmatpush2.msra.mxu0 0.0
    %357 = vmatprep.mubr.f32.mxu0 0.0
    %358 = vmatmul.mubr.f32.gmra.mxu0 %v291
    %v359 = vpop.f32.mrf.mxu0
    %v360 = vadd.f32 %v288, %v359
    %v361 = vpop.f32.mrf.mxu0
    %362 = vdwg.mxu0
    %v363 = vadd.f32 %v360, %v182
    %v364 = vmax.f32 %v363, 0.0
    %v365 = vld [vmem:[#allocation10] sm:$0xff]
    %v366 = vld [vmem:[#allocation10 + $0x8] sm:$0xff]
    %v367 = vld [vmem:[#allocation10 + $0x10] sm:$0xff]
    %v368 = vld [vmem:[#allocation10 + $0x18] sm:$0xff]
    %v369 = vld [vmem:[#allocation10 + $0x20] sm:$0xff]
    %v370 = vld [vmem:[#allocation10 + $0x28] sm:$0xff]
    %v371 = vld [vmem:[#allocation10 + $0x30] sm:$0xff]
    %v372 = vld [vmem:[#allocation10 + $0x38] sm:$0xff]
    %v373 = vld [vmem:[%s8] sm:$0x1]
    %v375 = vlaneseq
    %v376 = vshrl.u32 %v375, 7
    %v377 = vsub.s32 0, %v376
    %v378 = vrot.slane %v373, %v377
    %v381 = vsel %vm200, %v364, 0
    %383 = vmatprep.subr.mxu0 0.0
    %384 = vmatpush1.msra.mxu0 0.0
    %385 = vmatprep.subr.mxu0 0.0
    %386 = vmatpush1.msra.mxu0 0.0
    %387 = vmatprep.subr.mxu0 0.0
    %388 = vmatpush1.msra.mxu0 0.0
    %389 = vmatprep.subr.mxu0 0.0
    %390 = vmatpush1.msra.mxu0 0.0
    %391 = vmatprep.subr.mxu0 0.0
    %392 = vmatpush1.msra.mxu0 0.0
    %393 = vmatprep.subr.mxu0 0.0
    %394 = vmatpush1.msra.mxu0 0.0
    %395 = vmatprep.subr.mxu0 0.0
    %396 = vmatpush1.msra.mxu0 0.0
    %397 = vmatprep.subr.mxu0 0.0
    %398 = vmatpush1.msra.mxu0 0.0
    %399 = vmatprep.subr.mxu0 0.0
    %400 = vmatpush1.msra.mxu0 %v372
    %401 = vmatprep.subr.mxu0 0.0
    %402 = vmatpush1.msra.mxu0 %v371
    %403 = vmatprep.subr.mxu0 0.0
    %404 = vmatpush1.msra.mxu0 %v370
    %405 = vmatprep.subr.mxu0 0.0
    %406 = vmatpush1.msra.mxu0 %v369
    %407 = vmatprep.subr.mxu0 0.0
    %408 = vmatpush1.msra.mxu0 %v368
    %409 = vmatprep.subr.mxu0 0.0
    %410 = vmatpush1.msra.mxu0 %v367
    %411 = vmatprep.subr.mxu0 0.0
    %412 = vmatpush1.msra.mxu0 %v366
    %413 = vmatprep.subr.mxu0 0.0
    %414 = vmatpush1.msra.mxu0 %v365
    %415 = vmatprep.subr.mxu0 0.0
    %416 = vmatpush2.msra.mxu0 0.0
    %417 = vmatprep.subr.mxu0 0.0
    %418 = vmatpush2.msra.mxu0 0.0
    %419 = vmatprep.subr.mxu0 0.0
    %420 = vmatpush2.msra.mxu0 0.0
    %421 = vmatprep.subr.mxu0 0.0
    %422 = vmatpush2.msra.mxu0 0.0
    %423 = vmatprep.subr.mxu0 0.0
    %424 = vmatpush2.msra.mxu0 0.0
    %425 = vmatprep.subr.mxu0 0.0
    %426 = vmatpush2.msra.mxu0 0.0
    %427 = vmatprep.subr.mxu0 0.0
    %428 = vmatpush2.msra.mxu0 0.0
    %429 = vmatprep.subr.mxu0 0.0
    %430 = vmatpush2.msra.mxu0 0.0
    %431 = vmatprep.subr.mxu0 0.0
    %432 = vmatpush2.msra.mxu0 0.0
    %433 = vmatprep.subr.mxu0 0.0
    %434 = vmatpush2.msra.mxu0 0.0
    %435 = vmatprep.subr.mxu0 0.0
    %436 = vmatpush2.msra.mxu0 0.0
    %437 = vmatprep.subr.mxu0 0.0
    %438 = vmatpush2.msra.mxu0 0.0
    %439 = vmatprep.subr.mxu0 0.0
    %440 = vmatpush2.msra.mxu0 0.0
    %441 = vmatprep.subr.mxu0 0.0
    %442 = vmatpush2.msra.mxu0 0.0
    %443 = vmatprep.subr.mxu0 0.0
    %444 = vmatpush2.msra.mxu0 0.0
    %445 = vmatprep.subr.mxu0 0.0
    %446 = vmatpush2.msra.mxu0 0.0
    %447 = vmatprep.mubr.f32.mxu0 0.0
    %448 = vmatmul.mubr.f32.gmra.mxu0 %v381
    %v449 = vpop.f32.mrf.mxu0
    %v450 = vadd.f32 %v378, %v449
    %v451 = vpop.f32.mrf.mxu0
    %452 = vdwg.mxu0
    %453 = vst [vmem:[#allocation11] sm:$0xff] %v450
    // Predicated region
    $region58: #{tpu_custom_call.1} parent=1 // pred_check
      _
    $region59: #{tpu_custom_call.1} parent=1 // pred_check_branch
      %455 = sbr.rel (0) target = $region61
    $region60: #{tpu_custom_call.1} parent=1 // pred_region
      %s457 = ssub.s32 128, 128
      %458 = vsyncadd [#allocation4], %s457
      %s460 = sshll.u32 [#allocation11], 4
      %s461 = int_to_ptr.vmem [resolvable:$true] %s460
      %463 = dma.vmem_to_hbm [thread:$0]  %s461, 128, %s9, [#allocation4]
    $region61: #{tpu_custom_call.1} parent=1 // pred_fallthru
      _
    // Predicated region
    $region62: #{tpu_custom_call.1} parent=1 // pred_check
      _
    $region63: #{tpu_custom_call.1} parent=1 // pred_check_branch
      %465 = sbr.rel (0) target = $region65
    $region64: #{tpu_custom_call.1} parent=1 // pred_region
      %466 = dma.done [#allocation4], 128
    $region65: #{tpu_custom_call.1} parent=1 // pred_fallthru
      _
    %467 = vsyncpa [#allocation3], 1
    %468 = vsyncpa [#allocation6], 1
    %469 = vsyncpa [#allocation9], 1
    %470 = vsyncpa [#allocation4], 1

</llo_original>
